<compile_context>
chip_gen: v7x
topology: tpu7x:2x2x1
jax: 0.10.0
libtpu: 0.0.40
codegen_flags: <defaults>
</compile_context>

<pallas_src>
import functools

import jax
import jax.numpy as jnp
from jax.experimental import pallas as pl
from jax.experimental.pallas import tpu as pltpu


def _linear_kernel(x_ref, w_ref, b_ref, o_ref):
    """logits = x @ W_packed + b_packed (single MXU matmul, f32 accumulate).

    x_ref: (tm, in_features)            f32 or bf16
    w_ref: (in_features, n_pad)         f32 or bf16  (pre-packed, lane-dense N)
    b_ref: (1, n_pad)                   f32
    o_ref: (tm, n_pad)                  f32
    """
    logits = jnp.dot(x_ref[...], w_ref[...], preferred_element_type=jnp.float32)
    o_ref[...] = (logits + b_ref[...]).astype(o_ref.dtype)


def pack_params(weight, bias, compute_dtype=jnp.float32):
    """One-time pre-pack of nn.Linear params for the Pallas kernel.

    Args:
      weight: (num_classes, in_features) f32, native PyTorch nn.Linear layout.
      bias:   (num_classes,) f32.
      compute_dtype: dtype used for the matmul operands (f32 or bf16).

    Returns:
      w_packed:    (in_features, n_pad) compute_dtype, zero-padded columns.
      bias_packed: (1, n_pad) f32, zero-padded.
      num_classes: int (for slicing the padded logits back).
    """
    num_classes, in_features = weight.shape
    n_pad = pl.cdiv(num_classes, 128) * 128  # lane-dense output (>=128)
    w_packed = jnp.zeros((in_features, n_pad), compute_dtype)
    w_packed = w_packed.at[:, :num_classes].set(weight.T.astype(compute_dtype))
    bias_packed = jnp.zeros((1, n_pad), jnp.float32)
    bias_packed = bias_packed.at[:, :num_classes].set(bias.astype(jnp.float32))
    return w_packed, bias_packed, num_classes


def linear_classifier_forward(x, w_packed, bias_packed, num_classes, *, tile_m=256):
    """Pallas forward pass matching LinearClassifier.forward.

    Args:
      x: (b, 3, H, W) float32 image (NCHW, PyTorch convention).
      w_packed:    (in_features, n_pad) pre-packed weight (see pack_params).
      bias_packed: (1, n_pad) f32 pre-packed bias.
      num_classes: logical number of classes (static Python int).
      tile_m: batch tile when a batch grid is used.

    Returns:
      (b, num_classes) float32 logits.
    """
    b = x.shape[0]
    in_features, n_pad = w_packed.shape
    assert x.shape[1] * x.shape[2] * x.shape[3] == in_features

    # Flatten exactly like x.view(b, -1); cast activations to the weight's
    # compute dtype (no-op for the default f32 path).
    x_flat = x.reshape(b, in_features).astype(w_packed.dtype)

    itemsize = jnp.dtype(w_packed.dtype).itemsize
    cost = pl.CostEstimate(
        flops=2 * b * n_pad * in_features,
        transcendentals=0,
        bytes_accessed=itemsize * (b * in_features + in_features * n_pad)
        + 4 * (n_pad + b * n_pad),
    )

    out_shape = jax.ShapeDtypeStruct((b, n_pad), jnp.float32)

    # Large batches: 1-D "parallel" batch grid (uses both v7x TensorCores,
    # restores DMA/compute pipelining).  Small batches: single grid-less
    # invocation with everything VMEM-resident (x + W + out << 16 MiB, safely
    # under v5e's 16 MiB scoped default and v7x's 64 MiB physical VMEM).
    if b % tile_m == 0 and b // tile_m >= 2:
        logits_padded = pl.pallas_call(
            _linear_kernel,
            out_shape=out_shape,
            grid=(b // tile_m,),
            in_specs=[
                pl.BlockSpec((tile_m, in_features), lambda i: (i, 0)),
                pl.BlockSpec((in_features, n_pad), lambda i: (0, 0)),
                pl.BlockSpec((1, n_pad), lambda i: (0, 0)),
            ],
            out_specs=pl.BlockSpec((tile_m, n_pad), lambda i: (i, 0)),
            compiler_params=pltpu.CompilerParams(
                dimension_semantics=("parallel",),
            ),
            cost_estimate=cost,
        )(x_flat, w_packed, bias_packed)
    else:
        logits_padded = pl.pallas_call(
            _linear_kernel,
            out_shape=out_shape,
            in_specs=[
                pl.BlockSpec(memory_space=pltpu.MemorySpace.VMEM),  # x_flat
                pl.BlockSpec(memory_space=pltpu.MemorySpace.VMEM),  # w_packed
                pl.BlockSpec(memory_space=pltpu.MemorySpace.VMEM),  # bias
            ],
            out_specs=pl.BlockSpec(memory_space=pltpu.MemorySpace.VMEM),
            cost_estimate=cost,
        )(x_flat, w_packed, bias_packed)

    # Pad columns are exact zeros (weight + bias padded with 0), so this slice
    # recovers the logical logits exactly.
    return logits_padded[:, :num_classes]


def init_params(key, h: int = 64, w: int = 64, num_classes: int = 6):
    """Deterministic synthetic init matching nn.Linear(3*h*w, num_classes)."""
    in_features = 3 * h * w
    k_w, k_b = jax.random.split(key)
    bound = 1.0 / jnp.sqrt(jnp.float32(in_features))
    weight = jax.random.uniform(
        k_w, (num_classes, in_features), jnp.float32, -bound, bound
    )
    bias = jax.random.uniform(k_b, (num_classes,), jnp.float32, -bound, bound)
    return weight, bias


if __name__ == "__main__":
    # Small shapes consistent with the module (3-channel image, 6 classes).
    # Batch kept a multiple of 8 (f32 sublanes) per the perf review.
    H, W, NUM_CLASSES = 16, 16, 6
    BATCH = 8

    key = jax.random.PRNGKey(0)
    k_x, k_params = jax.random.split(key)

    x = jax.random.normal(k_x, (BATCH, 3, H, W), dtype=jnp.float32)
    weight, bias = init_params(k_params, H, W, NUM_CLASSES)

    # ---- default f32 path: exact PyTorch-module semantics -----------------
    w_p32, b_p32, nc = pack_params(weight, bias, jnp.float32)
    fwd = jax.jit(functools.partial(linear_classifier_forward, num_classes=nc))
    logits = fwd(x, w_p32, b_p32)
    jax.block_until_ready(logits)

    ref = x.reshape(BATCH, -1) @ weight.T + bias
    assert logits.shape == (BATCH, NUM_CLASSES)
    assert jnp.allclose(logits, ref, atol=1e-4, rtol=1e-4), float(
        jnp.max(jnp.abs(logits - ref))
    )

    # ---- optional bf16 path (halved HBM bytes; f32 accumulation) ----------
    w_p16, b_p16, _ = pack_params(weight, bias, jnp.bfloat16)
    logits_bf16 = fwd(x, w_p16, b_p16)
    jax.block_until_ready(logits_bf16)

    ref_bf16 = (
        x.reshape(BATCH, -1).astype(jnp.bfloat16).astype(jnp.float32)
        @ weight.T.astype(jnp.bfloat16).astype(jnp.float32)
        + bias
    )
    assert logits_bf16.shape == (BATCH, NUM_CLASSES)
    assert jnp.allclose(logits_bf16, ref_bf16, atol=5e-2, rtol=5e-2), float(
        jnp.max(jnp.abs(logits_bf16 - ref_bf16))
    )

    print("KERNEL_OK")
</pallas_src>

<mosaic_0001>
module attributes {stable_mosaic.version = 11 : i64} {
  func.func @_linear_kernel(%arg0: memref<8x768xf32, #tpu.memory_space<vmem>>, %arg1: memref<768x128xf32, #tpu.memory_space<vmem>>, %arg2: memref<1x128xf32, #tpu.memory_space<vmem>>, %arg3: memref<8x128xf32, #tpu.memory_space<vmem>>) attributes {dimension_semantics = [], scalar_prefetch = 0 : i64, scratch_operands = 0 : i64, tpu.core_type = #tpu.core_type<tc>} {
    %c0 = arith.constant 0 : index
    %c0_0 = arith.constant 0 : index
    %0 = vector.load %arg0[%c0, %c0_0] : memref<8x768xf32, #tpu.memory_space<vmem>>, vector<8x768xf32>
    %c0_1 = arith.constant 0 : index
    %c0_2 = arith.constant 0 : index
    %1 = vector.load %arg1[%c0_1, %c0_2] : memref<768x128xf32, #tpu.memory_space<vmem>>, vector<768x128xf32>
    %cst = arith.constant dense<0.000000e+00> : vector<8x128xf32>
    %2 = tpu.matmul %0, %1, %cst {dimension_numbers = #tpu.dot_dimension_numbers<[1], [0], [0], [1], [0, 0, 1, 1], [], []>} : vector<8x768xf32>, vector<768x128xf32>, vector<8x128xf32> -> vector<8x128xf32>
    %c0_3 = arith.constant 0 : index
    %c0_4 = arith.constant 0 : index
    %3 = vector.load %arg2[%c0_3, %c0_4] : memref<1x128xf32, #tpu.memory_space<vmem>>, vector<1x128xf32>
    %4 = vector.broadcast %3 : vector<1x128xf32> to vector<8x128xf32>
    %5 = arith.addf %2, %4 : vector<8x128xf32>
    %c0_5 = arith.constant 0 : index
    %c0_6 = arith.constant 0 : index
    %6 = vector.load %arg3[%c0_5, %c0_6] : memref<8x128xf32, #tpu.memory_space<vmem>>, vector<8x128xf32>
    tpu.vector_store %arg3[%c0_5, %c0_6], %5 {strides = array<i32>} : memref<8x128xf32, #tpu.memory_space<vmem>>, vector<8x128xf32>,
    return
  }
}

</mosaic_0001>

<llo_original>
// kernel: linear_classifier_forward.1
$region0: #{linear_classifier_forward.1}
  #allocation0 [shape = 'u32[]', space=smem, size = 0x4, offset = 0x4, fixed_abs, tag = 'smem constant byte address 0x4 - core index']
  #allocation1 [shape = 'u32[144,128]{1,0:T(1,128)}', space=vmem, size = 0x12000, scoped, tag = 'internal scratch']
  %s0 = inlined_call_operand.vmem [shape: f32[8,768], index: 0, kind: input, shape index: {}]
  %s1 = inlined_call_operand.hbm [shape: f32[768,128], index: 1, kind: input, shape index: {}]
  %s2 = inlined_call_operand.vmem [shape: f32[1,128], index: 2, kind: input, shape index: {}]
  %s3 = inlined_call_operand.hbm [shape: f32[8,128], index: 3, kind: output, shape index: {}]
  %s4 = sld [smem:[#allocation0]]
  $region26: #{linear_classifier_forward.1} parent=0
    _
  %s6 = ssub.s32 1, %s4
  %s7 = scalar_select 0, %s6, %s4
  $region1: #{linear_classifier_forward.1} parent=0
    #allocation2 [shape = 'u8[393216]{0}', space=vmem, size = 0x60000, scoped, tag = 'input window, operand 1, single buffered']
    #allocation3 [shape = 's32[1]{0}', space=sflag, size = 0x4, scoped, tag = 'scoped memory for linear_classifier_forward.1']
    #allocation4 [shape = 's32[1]{0}', space=sflag, size = 0x4, scoped, tag = 'scoped memory for linear_classifier_forward.1']
    #allocation5 [shape = 'u8[4096]{0}', space=vmem, size = 0x1000, scoped, tag = 'output window, operand 0, single buffered']
    %8 = vsyncpa [#allocation3], 0
    %9 = vsyncpa [#allocation4], 0
    // Predicated region
    $region2: #{linear_classifier_forward.1} parent=1 // pred_check
      _
    $region3: #{linear_classifier_forward.1} parent=1 // pred_check_branch
      %11 = sbr.rel (0) target = $region5
    $region4: #{linear_classifier_forward.1} parent=1 // pred_region
      _
    $region5: #{linear_classifier_forward.1} parent=1 // pred_fallthru
      _
    // Predicated region
    $region6: #{linear_classifier_forward.1} parent=1 // pred_check
      _
    $region7: #{linear_classifier_forward.1} parent=1 // pred_check_branch
      %13 = sbr.rel (0) target = $region9
    $region8: #{linear_classifier_forward.1} parent=1 // pred_region
      %s15 = ssub.s32 12288, 12288
      %16 = vsyncadd [#allocation3], %s15
      %s17 = sshll.u32 [#allocation2], 4
      %s18 = int_to_ptr.vmem [resolvable:$true] %s17
      %23 = dma.hbm_to_vmem [thread:$0]  %s1, 12288, %s18, [#allocation3], 128, 128, 8
    $region9: #{linear_classifier_forward.1} parent=1 // pred_fallthru
      _
    // Predicated region
    $region10: #{linear_classifier_forward.1} parent=1 // pred_check
      _
    $region11: #{linear_classifier_forward.1} parent=1 // pred_check_branch
      %25 = sbr.rel (0) target = $region13
    $region12: #{linear_classifier_forward.1} parent=1 // pred_region
      _
    $region13: #{linear_classifier_forward.1} parent=1 // pred_fallthru
      _
    // Predicated region
    $region14: #{linear_classifier_forward.1} parent=1 // pred_check
      _
    $region15: #{linear_classifier_forward.1} parent=1 // pred_check_branch
      %27 = sbr.rel (0) target = $region17
    $region16: #{linear_classifier_forward.1} parent=1 // pred_region
      %28 = dma.done [#allocation3], 12288
    $region17: #{linear_classifier_forward.1} parent=1 // pred_fallthru
      _
    %v29 = vld [vmem:[%s0] sm:$0xff]
    %v30 = vld [vmem:[%s0 + $0x8] sm:$0xff]
    %v31 = vld [vmem:[%s0 + $0x10] sm:$0xff]
    %v32 = vld [vmem:[%s0 + $0x18] sm:$0xff]
    %v33 = vld [vmem:[%s0 + $0x20] sm:$0xff]
    %v34 = vld [vmem:[%s0 + $0x28] sm:$0xff]
    %v35 = vld [vmem:[#allocation2] sm:$0xff]
    %v36 = vld [vmem:[#allocation2 + $0x8] sm:$0xff]
    %v37 = vld [vmem:[#allocation2 + $0x10] sm:$0xff]
    %v38 = vld [vmem:[#allocation2 + $0x18] sm:$0xff]
    %v39 = vld [vmem:[#allocation2 + $0x20] sm:$0xff]
    %v40 = vld [vmem:[#allocation2 + $0x28] sm:$0xff]
    %v41 = vld [vmem:[#allocation2 + $0x30] sm:$0xff]
    %v42 = vld [vmem:[#allocation2 + $0x38] sm:$0xff]
    %v43 = vld [vmem:[#allocation2 + $0x40] sm:$0xff]
    %v44 = vld [vmem:[#allocation2 + $0x48] sm:$0xff]
    %v45 = vld [vmem:[#allocation2 + $0x50] sm:$0xff]
    %v46 = vld [vmem:[#allocation2 + $0x58] sm:$0xff]
    %v47 = vld [vmem:[#allocation2 + $0x60] sm:$0xff]
    %v48 = vld [vmem:[#allocation2 + $0x68] sm:$0xff]
    %v49 = vld [vmem:[#allocation2 + $0x70] sm:$0xff]
    %v50 = vld [vmem:[#allocation2 + $0x78] sm:$0xff]
    %v51 = vld [vmem:[#allocation2 + $0x80] sm:$0xff]
    %v52 = vld [vmem:[#allocation2 + $0x88] sm:$0xff]
    %v53 = vld [vmem:[#allocation2 + $0x90] sm:$0xff]
    %v54 = vld [vmem:[#allocation2 + $0x98] sm:$0xff]
    %v55 = vld [vmem:[#allocation2 + $0xa0] sm:$0xff]
    %v56 = vld [vmem:[#allocation2 + $0xa8] sm:$0xff]
    %v57 = vld [vmem:[#allocation2 + $0xb0] sm:$0xff]
    %v58 = vld [vmem:[#allocation2 + $0xb8] sm:$0xff]
    %v59 = vld [vmem:[#allocation2 + $0xc0] sm:$0xff]
    %v60 = vld [vmem:[#allocation2 + $0xc8] sm:$0xff]
    %v61 = vld [vmem:[#allocation2 + $0xd0] sm:$0xff]
    %v62 = vld [vmem:[#allocation2 + $0xd8] sm:$0xff]
    %v63 = vld [vmem:[#allocation2 + $0xe0] sm:$0xff]
    %v64 = vld [vmem:[#allocation2 + $0xe8] sm:$0xff]
    %v65 = vld [vmem:[#allocation2 + $0xf0] sm:$0xff]
    %v66 = vld [vmem:[#allocation2 + $0xf8] sm:$0xff]
    %v67 = vld [vmem:[#allocation2 + $0x100] sm:$0xff]
    %v68 = vld [vmem:[#allocation2 + $0x108] sm:$0xff]
    %v69 = vld [vmem:[#allocation2 + $0x110] sm:$0xff]
    %v70 = vld [vmem:[#allocation2 + $0x118] sm:$0xff]
    %v71 = vld [vmem:[#allocation2 + $0x120] sm:$0xff]
    %v72 = vld [vmem:[#allocation2 + $0x128] sm:$0xff]
    %v73 = vld [vmem:[#allocation2 + $0x130] sm:$0xff]
    %v74 = vld [vmem:[#allocation2 + $0x138] sm:$0xff]
    %v75 = vld [vmem:[#allocation2 + $0x140] sm:$0xff]
    %v76 = vld [vmem:[#allocation2 + $0x148] sm:$0xff]
    %v77 = vld [vmem:[#allocation2 + $0x150] sm:$0xff]
    %v78 = vld [vmem:[#allocation2 + $0x158] sm:$0xff]
    %v79 = vld [vmem:[#allocation2 + $0x160] sm:$0xff]
    %v80 = vld [vmem:[#allocation2 + $0x168] sm:$0xff]
    %v81 = vld [vmem:[#allocation2 + $0x170] sm:$0xff]
    %v82 = vld [vmem:[#allocation2 + $0x178] sm:$0xff]
    %v83 = vld [vmem:[#allocation2 + $0x180] sm:$0xff]
    %v84 = vld [vmem:[#allocation2 + $0x188] sm:$0xff]
    %v85 = vld [vmem:[#allocation2 + $0x190] sm:$0xff]
    %v86 = vld [vmem:[#allocation2 + $0x198] sm:$0xff]
    %v87 = vld [vmem:[#allocation2 + $0x1a0] sm:$0xff]
    %v88 = vld [vmem:[#allocation2 + $0x1a8] sm:$0xff]
    %v89 = vld [vmem:[#allocation2 + $0x1b0] sm:$0xff]
    %v90 = vld [vmem:[#allocation2 + $0x1b8] sm:$0xff]
    %v91 = vld [vmem:[#allocation2 + $0x1c0] sm:$0xff]
    %v92 = vld [vmem:[#allocation2 + $0x1c8] sm:$0xff]
    %v93 = vld [vmem:[#allocation2 + $0x1d0] sm:$0xff]
    %v94 = vld [vmem:[#allocation2 + $0x1d8] sm:$0xff]
    %v95 = vld [vmem:[#allocation2 + $0x1e0] sm:$0xff]
    %v96 = vld [vmem:[#allocation2 + $0x1e8] sm:$0xff]
    %v97 = vld [vmem:[#allocation2 + $0x1f0] sm:$0xff]
    %v98 = vld [vmem:[#allocation2 + $0x1f8] sm:$0xff]
    %v99 = vld [vmem:[#allocation2 + $0x200] sm:$0xff]
    %v100 = vld [vmem:[#allocation2 + $0x208] sm:$0xff]
    %v101 = vld [vmem:[#allocation2 + $0x210] sm:$0xff]
    %v102 = vld [vmem:[#allocation2 + $0x218] sm:$0xff]
    %v103 = vld [vmem:[#allocation2 + $0x220] sm:$0xff]
    %v104 = vld [vmem:[#allocation2 + $0x228] sm:$0xff]
    %v105 = vld [vmem:[#allocation2 + $0x230] sm:$0xff]
    %v106 = vld [vmem:[#allocation2 + $0x238] sm:$0xff]
    %v107 = vld [vmem:[#allocation2 + $0x240] sm:$0xff]
    %v108 = vld [vmem:[#allocation2 + $0x248] sm:$0xff]
    %v109 = vld [vmem:[#allocation2 + $0x250] sm:$0xff]
    %v110 = vld [vmem:[#allocation2 + $0x258] sm:$0xff]
    %v111 = vld [vmem:[#allocation2 + $0x260] sm:$0xff]
    %v112 = vld [vmem:[#allocation2 + $0x268] sm:$0xff]
    %v113 = vld [vmem:[#allocation2 + $0x270] sm:$0xff]
    %v114 = vld [vmem:[#allocation2 + $0x278] sm:$0xff]
    %v115 = vld [vmem:[#allocation2 + $0x280] sm:$0xff]
    %v116 = vld [vmem:[#allocation2 + $0x288] sm:$0xff]
    %v117 = vld [vmem:[#allocation2 + $0x290] sm:$0xff]
    %v118 = vld [vmem:[#allocation2 + $0x298] sm:$0xff]
    %v119 = vld [vmem:[#allocation2 + $0x2a0] sm:$0xff]
    %v120 = vld [vmem:[#allocation2 + $0x2a8] sm:$0xff]
    %v121 = vld [vmem:[#allocation2 + $0x2b0] sm:$0xff]
    %v122 = vld [vmem:[#allocation2 + $0x2b8] sm:$0xff]
    %v123 = vld [vmem:[#allocation2 + $0x2c0] sm:$0xff]
    %v124 = vld [vmem:[#allocation2 + $0x2c8] sm:$0xff]
    %v125 = vld [vmem:[#allocation2 + $0x2d0] sm:$0xff]
    %v126 = vld [vmem:[#allocation2 + $0x2d8] sm:$0xff]
    %v127 = vld [vmem:[#allocation2 + $0x2e0] sm:$0xff]
    %v128 = vld [vmem:[#allocation2 + $0x2e8] sm:$0xff]
    %v129 = vld [vmem:[#allocation2 + $0x2f0] sm:$0xff]
    %v130 = vld [vmem:[#allocation2 + $0x2f8] sm:$0xff]
    %v131 = vld [vmem:[%s2] sm:$0x1]
    %v133 = vlaneseq
    %v134 = vshrl.u32 %v133, 7
    %v135 = vsub.s32 0, %v134
    %v136 = vrot.slane %v131, %v135
    %138 = vmatprep.subr.mxu0 0.0
    %139 = vmatpush1.msra.mxu0 %v35
    %140 = vmatprep.subr.mxu0 0.0
    %141 = vmatpush1.msra.mxu0 %v36
    %142 = vmatprep.subr.mxu0 0.0
    %143 = vmatpush1.msra.mxu0 %v37
    %144 = vmatprep.subr.mxu0 0.0
    %145 = vmatpush1.msra.mxu0 %v38
    %146 = vmatprep.subr.mxu0 0.0
    %147 = vmatpush1.msra.mxu0 %v39
    %148 = vmatprep.subr.mxu0 0.0
    %149 = vmatpush1.msra.mxu0 %v40
    %150 = vmatprep.subr.mxu0 0.0
    %151 = vmatpush1.msra.mxu0 %v41
    %152 = vmatprep.subr.mxu0 0.0
    %153 = vmatpush1.msra.mxu0 %v42
    %154 = vmatprep.subr.mxu0 0.0
    %155 = vmatpush1.msra.mxu0 %v43
    %156 = vmatprep.subr.mxu0 0.0
    %157 = vmatpush1.msra.mxu0 %v44
    %158 = vmatprep.subr.mxu0 0.0
    %159 = vmatpush1.msra.mxu0 %v45
    %160 = vmatprep.subr.mxu0 0.0
    %161 = vmatpush1.msra.mxu0 %v46
    %162 = vmatprep.subr.mxu0 0.0
    %163 = vmatpush1.msra.mxu0 %v47
    %164 = vmatprep.subr.mxu0 0.0
    %165 = vmatpush1.msra.mxu0 %v48
    %166 = vmatprep.subr.mxu0 0.0
    %167 = vmatpush1.msra.mxu0 %v49
    %168 = vmatprep.subr.mxu0 0.0
    %169 = vmatpush1.msra.mxu0 %v50
    %170 = vmatprep.subr.mxu0 0.0
    %171 = vmatpush1.msra.mxu0 %v51
    %172 = vmatprep.subr.mxu0 0.0
    %173 = vmatpush1.msra.mxu0 %v52
    %174 = vmatprep.subr.mxu0 0.0
    %175 = vmatpush1.msra.mxu0 %v53
    %176 = vmatprep.subr.mxu0 0.0
    %177 = vmatpush1.msra.mxu0 %v54
    %178 = vmatprep.subr.mxu0 0.0
    %179 = vmatpush1.msra.mxu0 %v55
    %180 = vmatprep.subr.mxu0 0.0
    %181 = vmatpush1.msra.mxu0 %v56
    %182 = vmatprep.subr.mxu0 0.0
    %183 = vmatpush1.msra.mxu0 %v57
    %184 = vmatprep.subr.mxu0 0.0
    %185 = vmatpush1.msra.mxu0 %v58
    %186 = vmatprep.subr.mxu0 0.0
    %187 = vmatpush1.msra.mxu0 %v59
    %188 = vmatprep.subr.mxu0 0.0
    %189 = vmatpush1.msra.mxu0 %v60
    %190 = vmatprep.subr.mxu0 0.0
    %191 = vmatpush1.msra.mxu0 %v61
    %192 = vmatprep.subr.mxu0 0.0
    %193 = vmatpush1.msra.mxu0 %v62
    %194 = vmatprep.subr.mxu0 0.0
    %195 = vmatpush1.msra.mxu0 %v63
    %196 = vmatprep.subr.mxu0 0.0
    %197 = vmatpush1.msra.mxu0 %v64
    %198 = vmatprep.subr.mxu0 0.0
    %199 = vmatpush1.msra.mxu0 %v65
    %200 = vmatprep.subr.mxu0 0.0
    %201 = vmatpush1.msra.mxu0 %v66
    %202 = vmatprep.mubr.f32.mxu0 %v30
    %203 = vmatmul.mubr.f32.gmra.mrb[0].mxu0 %v29
    %v204 = vpop.f32.mrb[0].mxu0
    %v205 = vadd.f32 %v136, %v204
    %v206 = vpop.f32.mrb[0].mxu0
    %207 = vdwg.mxu0
    %208 = vmatprep.subr.mxu0 0.0
    %209 = vmatpush1.msra.mxu0 %v67
    %210 = vmatprep.subr.mxu0 0.0
    %211 = vmatpush1.msra.mxu0 %v68
    %212 = vmatprep.subr.mxu0 0.0
    %213 = vmatpush1.msra.mxu0 %v69
    %214 = vmatprep.subr.mxu0 0.0
    %215 = vmatpush1.msra.mxu0 %v70
    %216 = vmatprep.subr.mxu0 0.0
    %217 = vmatpush1.msra.mxu0 %v71
    %218 = vmatprep.subr.mxu0 0.0
    %219 = vmatpush1.msra.mxu0 %v72
    %220 = vmatprep.subr.mxu0 0.0
    %221 = vmatpush1.msra.mxu0 %v73
    %222 = vmatprep.subr.mxu0 0.0
    %223 = vmatpush1.msra.mxu0 %v74
    %224 = vmatprep.subr.mxu0 0.0
    %225 = vmatpush1.msra.mxu0 %v75
    %226 = vmatprep.subr.mxu0 0.0
    %227 = vmatpush1.msra.mxu0 %v76
    %228 = vmatprep.subr.mxu0 0.0
    %229 = vmatpush1.msra.mxu0 %v77
    %230 = vmatprep.subr.mxu0 0.0
    %231 = vmatpush1.msra.mxu0 %v78
    %232 = vmatprep.subr.mxu0 0.0
    %233 = vmatpush1.msra.mxu0 %v79
    %234 = vmatprep.subr.mxu0 0.0
    %235 = vmatpush1.msra.mxu0 %v80
    %236 = vmatprep.subr.mxu0 0.0
    %237 = vmatpush1.msra.mxu0 %v81
    %238 = vmatprep.subr.mxu0 0.0
    %239 = vmatpush1.msra.mxu0 %v82
    %240 = vmatprep.subr.mxu0 0.0
    %241 = vmatpush1.msra.mxu0 %v83
    %242 = vmatprep.subr.mxu0 0.0
    %243 = vmatpush1.msra.mxu0 %v84
    %244 = vmatprep.subr.mxu0 0.0
    %245 = vmatpush1.msra.mxu0 %v85
    %246 = vmatprep.subr.mxu0 0.0
    %247 = vmatpush1.msra.mxu0 %v86
    %248 = vmatprep.subr.mxu0 0.0
    %249 = vmatpush1.msra.mxu0 %v87
    %250 = vmatprep.subr.mxu0 0.0
    %251 = vmatpush1.msra.mxu0 %v88
    %252 = vmatprep.subr.mxu0 0.0
    %253 = vmatpush1.msra.mxu0 %v89
    %254 = vmatprep.subr.mxu0 0.0
    %255 = vmatpush1.msra.mxu0 %v90
    %256 = vmatprep.subr.mxu0 0.0
    %257 = vmatpush1.msra.mxu0 %v91
    %258 = vmatprep.subr.mxu0 0.0
    %259 = vmatpush1.msra.mxu0 %v92
    %260 = vmatprep.subr.mxu0 0.0
    %261 = vmatpush1.msra.mxu0 %v93
    %262 = vmatprep.subr.mxu0 0.0
    %263 = vmatpush1.msra.mxu0 %v94
    %264 = vmatprep.subr.mxu0 0.0
    %265 = vmatpush1.msra.mxu0 %v95
    %266 = vmatprep.subr.mxu0 0.0
    %267 = vmatpush1.msra.mxu0 %v96
    %268 = vmatprep.subr.mxu0 0.0
    %269 = vmatpush1.msra.mxu0 %v97
    %270 = vmatprep.subr.mxu0 0.0
    %271 = vmatpush1.msra.mxu0 %v98
    %272 = vmatprep.mubr.f32.mxu0 %v32
    %273 = vmatmul.mubr.f32.gmra.mrb[0].mxu0 %v31
    %v274 = vpop.f32.mrb[0].mxu0
    %v275 = vadd.f32 %v205, %v274
    %v276 = vpop.f32.mrb[0].mxu0
    %277 = vdwg.mxu0
    %278 = vmatprep.subr.mxu0 0.0
    %279 = vmatpush1.msra.mxu0 %v99
    %280 = vmatprep.subr.mxu0 0.0
    %281 = vmatpush1.msra.mxu0 %v100
    %282 = vmatprep.subr.mxu0 0.0
    %283 = vmatpush1.msra.mxu0 %v101
    %284 = vmatprep.subr.mxu0 0.0
    %285 = vmatpush1.msra.mxu0 %v102
    %286 = vmatprep.subr.mxu0 0.0
    %287 = vmatpush1.msra.mxu0 %v103
    %288 = vmatprep.subr.mxu0 0.0
    %289 = vmatpush1.msra.mxu0 %v104
    %290 = vmatprep.subr.mxu0 0.0
    %291 = vmatpush1.msra.mxu0 %v105
    %292 = vmatprep.subr.mxu0 0.0
    %293 = vmatpush1.msra.mxu0 %v106
    %294 = vmatprep.subr.mxu0 0.0
    %295 = vmatpush1.msra.mxu0 %v107
    %296 = vmatprep.subr.mxu0 0.0
    %297 = vmatpush1.msra.mxu0 %v108
    %298 = vmatprep.subr.mxu0 0.0
    %299 = vmatpush1.msra.mxu0 %v109
    %300 = vmatprep.subr.mxu0 0.0
    %301 = vmatpush1.msra.mxu0 %v110
    %302 = vmatprep.subr.mxu0 0.0
    %303 = vmatpush1.msra.mxu0 %v111
    %304 = vmatprep.subr.mxu0 0.0
    %305 = vmatpush1.msra.mxu0 %v112
    %306 = vmatprep.subr.mxu0 0.0
    %307 = vmatpush1.msra.mxu0 %v113
    %308 = vmatprep.subr.mxu0 0.0
    %309 = vmatpush1.msra.mxu0 %v114
    %310 = vmatprep.subr.mxu0 0.0
    %311 = vmatpush1.msra.mxu0 %v115
    %312 = vmatprep.subr.mxu0 0.0
    %313 = vmatpush1.msra.mxu0 %v116
    %314 = vmatprep.subr.mxu0 0.0
    %315 = vmatpush1.msra.mxu0 %v117
    %316 = vmatprep.subr.mxu0 0.0
    %317 = vmatpush1.msra.mxu0 %v118
    %318 = vmatprep.subr.mxu0 0.0
    %319 = vmatpush1.msra.mxu0 %v119
    %320 = vmatprep.subr.mxu0 0.0
    %321 = vmatpush1.msra.mxu0 %v120
    %322 = vmatprep.subr.mxu0 0.0
    %323 = vmatpush1.msra.mxu0 %v121
    %324 = vmatprep.subr.mxu0 0.0
    %325 = vmatpush1.msra.mxu0 %v122
    %326 = vmatprep.subr.mxu0 0.0
    %327 = vmatpush1.msra.mxu0 %v123
    %328 = vmatprep.subr.mxu0 0.0
    %329 = vmatpush1.msra.mxu0 %v124
    %330 = vmatprep.subr.mxu0 0.0
    %331 = vmatpush1.msra.mxu0 %v125
    %332 = vmatprep.subr.mxu0 0.0
    %333 = vmatpush1.msra.mxu0 %v126
    %334 = vmatprep.subr.mxu0 0.0
    %335 = vmatpush1.msra.mxu0 %v127
    %336 = vmatprep.subr.mxu0 0.0
    %337 = vmatpush1.msra.mxu0 %v128
    %338 = vmatprep.subr.mxu0 0.0
    %339 = vmatpush1.msra.mxu0 %v129
    %340 = vmatprep.subr.mxu0 0.0
    %341 = vmatpush1.msra.mxu0 %v130
    %342 = vmatprep.mubr.f32.mxu0 %v34
    %343 = vmatmul.mubr.f32.gmra.mrb[0].mxu0 %v33
    %v344 = vpop.f32.mrb[0].mxu0
    %v345 = vadd.f32 %v275, %v344
    %v346 = vpop.f32.mrb[0].mxu0
    %347 = vdwg.mxu0
    %348 = vst [vmem:[#allocation5] sm:$0xff] %v345
    // Predicated region
    $region18: #{linear_classifier_forward.1} parent=1 // pred_check
      _
    $region19: #{linear_classifier_forward.1} parent=1 // pred_check_branch
      %350 = sbr.rel (0) target = $region21
    $region20: #{linear_classifier_forward.1} parent=1 // pred_region
      %s352 = ssub.s32 128, 128
      %353 = vsyncadd [#allocation4], %s352
      %s355 = sshll.u32 [#allocation5], 4
      %s356 = int_to_ptr.vmem [resolvable:$true] %s355
      %358 = dma.vmem_to_hbm [thread:$0]  %s356, 128, %s3, [#allocation4]
    $region21: #{linear_classifier_forward.1} parent=1 // pred_fallthru
      _
    // Predicated region
    $region22: #{linear_classifier_forward.1} parent=1 // pred_check
      _
    $region23: #{linear_classifier_forward.1} parent=1 // pred_check_branch
      %360 = sbr.rel (0) target = $region25
    $region24: #{linear_classifier_forward.1} parent=1 // pred_region
      %361 = dma.done [#allocation4], 128
    $region25: #{linear_classifier_forward.1} parent=1 // pred_fallthru
      _
    %362 = vsyncpa [#allocation3], 1
    %363 = vsyncpa [#allocation4], 1

</llo_original>
